<compile_context>
chip_gen: v7x
topology: tpu7x:2x2x1
jax: 0.10.0
libtpu: 0.0.40
codegen_flags: <defaults>
</compile_context>

<pallas_src>
import functools

import jax
import jax.numpy as jnp
from jax.experimental import pallas as pl
from jax.experimental.pallas import tpu as pltpu


def _round_up(x, m):
    return ((x + m - 1) // m) * m


def _qnet_kernel(x_ref, w1_ref, b1_ref, wh_ref, bh_ref,
                 policy_ref, value_ref, *, num_outputs):
    """One batch tile: fused hidden + (actor|critic) head, narrow outputs."""
    w1 = w1_ref[...]                              # [In, 128]  (f32 or bf16)
    x = x_ref[...].astype(w1.dtype)               # [TB, In]

    # Hidden layer: MXU matmul with f32 accumulation, elementwise math in f32.
    h = jnp.dot(x, w1, preferred_element_type=jnp.float32) + b1_ref[...]
    h = jnp.maximum(h, 0.0)                       # [TB, 128] f32

    # Fused actor+critic head — kept in f32 (cheap; keeps critic precise).
    head = jnp.dot(h, wh_ref[...],
                   preferred_element_type=jnp.float32) + bh_ref[...]  # [TB, HW]

    # Masked softmax over the first `num_outputs` lanes only.
    col = jax.lax.broadcasted_iota(jnp.int32, head.shape, 1)
    actor_mask = col < num_outputs
    logits = jnp.where(actor_mask, head, -jnp.inf)
    m = jnp.max(logits, axis=-1, keepdims=True)
    e = jnp.exp(logits - m)                       # padded lanes -> exp(-inf) = 0
    denom = jnp.sum(e, axis=-1, keepdims=True)
    policy = e / denom                            # exact divide: kernel is mem-bound

    policy_ref[...] = policy[:, :num_outputs].astype(policy_ref.dtype)
    value_ref[...] = head[:, num_outputs:num_outputs + 1].astype(value_ref.dtype)


def _vmem_estimate_bytes(tb, num_inputs, hidden, head_width,
                         x_itemsize, out_itemsize):
    lane = 128
    xin = 2 * tb * _round_up(num_inputs, lane) * x_itemsize     # double-buffered x
    outs = 2 * 2 * tb * lane * out_itemsize                     # policy + value bufs
    w = (_round_up(num_inputs, 8) * hidden + hidden
         + hidden * head_width + head_width) * 4                # resident params
    inter = 6 * tb * head_width * 4                             # h/head/logits/e/...
    return xin + outs + w + inter


def qnet_forward(x, params, *, out_dtype=jnp.float32, batch_tile=512):
    """x: [B, num_inputs] float32.

    Returns (policy [B, num_outputs], value [B, 1]) in `out_dtype`.
    """
    w1 = params["w1"]          # [num_inputs, hidden]   f32 or bf16 (pre-cast)
    b1 = params["b1"]          # [1, hidden]            f32
    wh = params["w_head"]      # [hidden, head_width]   f32 (kept f32 for critic)
    bh = params["b_head"]      # [1, head_width]        f32
    num_outputs = params["num_outputs"]

    B, num_inputs = x.shape
    hidden = w1.shape[1]
    head_width = wh.shape[1]

    # Pad batch to an 8-sublane-aligned multiple of the batch tile.
    b8 = _round_up(max(B, 1), 8)
    tb = min(batch_tile, b8)
    # v7x: make sure the (parallel) grid has >= 2 steps when there is enough
    # batch to split, so both TensorCores engage.  Neutral on v5e/v6e.
    if b8 // tb < 2 and b8 >= 16:
        tb = _round_up((b8 + 1) // 2, 8)
    b_pad = _round_up(b8, tb)
    if b_pad != B:
        x = jnp.pad(x, ((0, b_pad - B), (0, 0)))

    grid = (b_pad // tb,)
    kernel = functools.partial(_qnet_kernel, num_outputs=num_outputs)

    resident = pl.Buffered(1)  # constant index_map -> no second pipeline buffer
    est = _vmem_estimate_bytes(tb, num_inputs, hidden, head_width,
                               jnp.dtype(x.dtype).itemsize,
                               jnp.dtype(out_dtype).itemsize)
    vmem_limit = int(min(64 << 20, max(32 << 20, 2 * est)))

    policy, value = pl.pallas_call(
        kernel,
        out_shape=(
            jax.ShapeDtypeStruct((b_pad, num_outputs), out_dtype),
            jax.ShapeDtypeStruct((b_pad, 1), out_dtype),
        ),
        grid=grid,
        in_specs=[
            pl.BlockSpec((tb, num_inputs), lambda i: (i, 0)),          # x tile
            pl.BlockSpec((num_inputs, hidden), lambda i: (0, 0),
                         pipeline_mode=resident),                       # w1
            pl.BlockSpec((1, hidden), lambda i: (0, 0),
                         pipeline_mode=resident),                       # b1
            pl.BlockSpec((hidden, head_width), lambda i: (0, 0),
                         pipeline_mode=resident),                       # fused head W
            pl.BlockSpec((1, head_width), lambda i: (0, 0),
                         pipeline_mode=resident),                       # fused head b
        ],
        out_specs=(
            pl.BlockSpec((tb, num_outputs), lambda i: (i, 0)),          # policy
            pl.BlockSpec((tb, 1), lambda i: (i, 0)),                    # value
        ),
        compiler_params=pltpu.CompilerParams(
            dimension_semantics=("parallel",),
            vmem_limit_bytes=vmem_limit,
        ),
    )(x, w1, b1, wh, bh)

    if b_pad != B:
        policy = policy[:B]
        value = value[:B]
    return policy, value


# ----------------------------- parameters -----------------------------------

def _xavier_uniform(key, fan_in, fan_out):
    # matches nn.init.xavier_uniform_ (gain=1); stored as [in, out]
    limit = jnp.sqrt(6.0 / (fan_in + fan_out))
    return jax.random.uniform(key, (fan_in, fan_out), jnp.float32, -limit, limit)


def init_qnet_params(key, num_inputs, num_outputs, hidden=128):
    k1, k2, k3, k4, k5, k6 = jax.random.split(key, 6)
    w1 = _xavier_uniform(k1, num_inputs, hidden)          # [In, 128]
    b1 = 0.01 * jax.random.normal(k4, (1, hidden), jnp.float32)

    wa = _xavier_uniform(k2, hidden, num_outputs)         # actor  [128, A]
    wc = _xavier_uniform(k3, hidden, 1)                   # critic [128, 1]
    ba = 0.01 * jax.random.normal(k5, (1, num_outputs), jnp.float32)
    bc = 0.01 * jax.random.normal(k6, (1, 1), jnp.float32)

    # Fuse actor + critic into one lane-dense (128-wide) head.
    head_width = _round_up(num_outputs + 1, 128)
    w_head = jnp.zeros((hidden, head_width), jnp.float32)
    w_head = w_head.at[:, :num_outputs].set(wa)
    w_head = w_head.at[:, num_outputs:num_outputs + 1].set(wc)
    b_head = jnp.zeros((1, head_width), jnp.float32)
    b_head = b_head.at[:, :num_outputs].set(ba)
    b_head = b_head.at[:, num_outputs:num_outputs + 1].set(bc)

    return {
        "w1": w1, "b1": b1,
        "w_head": w_head, "b_head": b_head,
        "num_outputs": num_outputs,
    }


def cast_qnet_params(params, matmul_dtype):
    """Pre-cast (once) the hidden-layer weight for the reduced-precision path.

    The fused head weight stays f32 so the critic value is not quantized
    through low-precision activations; biases stay f32.
    """
    out = dict(params)
    out["w1"] = params["w1"].astype(matmul_dtype)
    return out


def qnet_reference(x, params):
    w1, b1 = params["w1"].astype(jnp.float32), params["b1"]
    wh, bh = params["w_head"], params["b_head"]
    a = params["num_outputs"]
    h = jnp.maximum(x @ w1 + b1, 0.0)
    logits = h @ wh[:, :a] + bh[:, :a]
    policy = jax.nn.softmax(logits, axis=-1)
    value = h @ wh[:, a:a + 1] + bh[:, a:a + 1]
    return policy, value


# ------------------------------ demo / test ----------------------------------

if __name__ == "__main__":
    key = jax.random.PRNGKey(0)
    num_inputs, num_outputs = 4, 2          # CartPole-like dims
    kp, kx1, kx2 = jax.random.split(key, 3)
    params = init_qnet_params(kp, num_inputs, num_outputs)

    # --- small odd batch: exercises sublane padding, single grid step -------
    x = jax.random.normal(kx1, (6, num_inputs), jnp.float32)
    ref_policy, ref_value = qnet_reference(x, params)

    policy, value = qnet_forward(x, params, out_dtype=jnp.float32)
    jax.block_until_ready((policy, value))
    assert policy.shape == (6, num_outputs)
    assert value.shape == (6, 1)
    assert jnp.allclose(policy, ref_policy, atol=1e-5)
    assert jnp.allclose(value, ref_value, atol=1e-5)
    assert jnp.allclose(jnp.sum(policy, axis=-1), 1.0, atol=1e-5)

    # --- larger batch: exercises the >=2-step parallel grid path ------------
    x2 = jax.random.normal(kx2, (40, num_inputs), jnp.float32)
    ref_policy2, ref_value2 = qnet_reference(x2, params)
    policy2, value2 = qnet_forward(x2, params, out_dtype=jnp.float32)
    jax.block_until_ready((policy2, value2))
    assert policy2.shape == (40, num_outputs)
    assert value2.shape == (40, 1)
    assert jnp.allclose(policy2, ref_policy2, atol=1e-5)
    assert jnp.allclose(value2, ref_value2, atol=1e-5)

    # --- bf16 path: pre-cast w1 once, bf16 outputs, f32 math/head -----------
    params_bf = cast_qnet_params(params, jnp.bfloat16)
    policy_bf, value_bf = qnet_forward(x, params_bf, out_dtype=jnp.bfloat16)
    jax.block_until_ready((policy_bf, value_bf))
    assert policy_bf.dtype == jnp.bfloat16 and value_bf.dtype == jnp.bfloat16
    assert jnp.allclose(policy_bf.astype(jnp.float32), ref_policy, atol=3e-2)
    assert jnp.allclose(value_bf.astype(jnp.float32), ref_value, atol=3e-2)

    print("KERNEL_OK")
</pallas_src>

<mosaic_0001>
module attributes {stable_mosaic.version = 11 : i64} {
  func.func @_qnet_kernel(%arg0: i32, %arg1: memref<8x4xf32, #tpu.memory_space<vmem>>, %arg2: memref<4x128xf32, #tpu.memory_space<vmem>>, %arg3: memref<1x128xf32, #tpu.memory_space<vmem>>, %arg4: memref<128x128xf32, #tpu.memory_space<vmem>>, %arg5: memref<1x128xf32, #tpu.memory_space<vmem>>, %arg6: memref<8x2xf32, #tpu.memory_space<vmem>>, %arg7: memref<8x1xf32, #tpu.memory_space<vmem>>) attributes {dimension_semantics = [#tpu.dimension_semantics<parallel>], iteration_bounds = array<i64: 1>, scalar_prefetch = 0 : i64, scratch_operands = 0 : i64, tpu.core_type = #tpu.core_type<tc>, window_params = [{transform_indices = @transform_0, window_bounds = array<i64: 8, 4>}, {pipeline_mode = #tpu.pipeline_mode<synchronous>, transform_indices = @transform_1, window_bounds = array<i64: 4, 128>}, {pipeline_mode = #tpu.pipeline_mode<synchronous>, transform_indices = @transform_2, window_bounds = array<i64: 1, 128>}, {pipeline_mode = #tpu.pipeline_mode<synchronous>, transform_indices = @transform_3, window_bounds = array<i64: 128, 128>}, {pipeline_mode = #tpu.pipeline_mode<synchronous>, transform_indices = @transform_4, window_bounds = array<i64: 1, 128>}, {transform_indices = @transform_5, window_bounds = array<i64: 8, 2>}, {transform_indices = @transform_6, window_bounds = array<i64: 8, 1>}]} {
    %c0 = arith.constant 0 : index
    %c0_0 = arith.constant 0 : index
    %0 = vector.load %arg2[%c0, %c0_0] : memref<4x128xf32, #tpu.memory_space<vmem>>, vector<4x128xf32>
    %c0_1 = arith.constant 0 : index
    %c0_2 = arith.constant 0 : index
    %1 = vector.load %arg1[%c0_1, %c0_2] : memref<8x4xf32, #tpu.memory_space<vmem>>, vector<8x4xf32>
    %cst = arith.constant dense<0.000000e+00> : vector<8x128xf32>
    %2 = tpu.matmul %1, %0, %cst {dimension_numbers = #tpu.dot_dimension_numbers<[1], [0], [0], [1], [0, 0, 1, 1], [], []>} : vector<8x4xf32>, vector<4x128xf32>, vector<8x128xf32> -> vector<8x128xf32>
    %c0_3 = arith.constant 0 : index
    %c0_4 = arith.constant 0 : index
    %3 = vector.load %arg3[%c0_3, %c0_4] : memref<1x128xf32, #tpu.memory_space<vmem>>, vector<1x128xf32>
    %4 = vector.broadcast %3 : vector<1x128xf32> to vector<8x128xf32>
    %5 = arith.addf %2, %4 : vector<8x128xf32>
    %cst_5 = arith.constant 0.000000e+00 : f32
    %6 = vector.broadcast %cst_5 : f32 to vector<8x128xf32>
    %7 = arith.maximumf %5, %6 : vector<8x128xf32>
    %c0_6 = arith.constant 0 : index
    %c0_7 = arith.constant 0 : index
    %8 = vector.load %arg4[%c0_6, %c0_7] : memref<128x128xf32, #tpu.memory_space<vmem>>, vector<128x128xf32>
    %cst_8 = arith.constant dense<0.000000e+00> : vector<8x128xf32>
    %9 = tpu.matmul %7, %8, %cst_8 {dimension_numbers = #tpu.dot_dimension_numbers<[1], [0], [0], [1], [0, 0, 1, 1], [], []>} : vector<8x128xf32>, vector<128x128xf32>, vector<8x128xf32> -> vector<8x128xf32>
    %c0_9 = arith.constant 0 : index
    %c0_10 = arith.constant 0 : index
    %10 = vector.load %arg5[%c0_9, %c0_10] : memref<1x128xf32, #tpu.memory_space<vmem>>, vector<1x128xf32>
    %11 = vector.broadcast %10 : vector<1x128xf32> to vector<8x128xf32>
    %12 = arith.addf %9, %11 : vector<8x128xf32>
    %13 = tpu.iota {dimensions = array<i32: 1>} : vector<8x128xi32>
    %c2_i32 = arith.constant 2 : i32
    %14 = vector.broadcast %c2_i32 : i32 to vector<8x128xi32>
    %15 = arith.cmpi slt, %13, %14 : vector<8x128xi32>
    %cst_11 = arith.constant 0xFF800000 : f32
    %16 = vector.broadcast %cst_11 : f32 to vector<8x128xf32>
    %17 = arith.select %15, %12, %16 : vector<8x128xi1>, vector<8x128xf32>
    %cst_12 = arith.constant dense<0xFF800000> : vector<8xf32>
    %18 = vector.multi_reduction <maximumf>, %17, %cst_12 [1] : vector<8x128xf32> to vector<8xf32>
    %19 = vector.shape_cast %18 : vector<8xf32> to vector<8x1xf32>
    %20 = vector.broadcast %19 : vector<8x1xf32> to vector<8x128xf32>
    %21 = arith.subf %17, %20 : vector<8x128xf32>
    %22 = math.exp %21 : vector<8x128xf32>
    %cst_13 = arith.constant dense<0.000000e+00> : vector<8xf32>
    %23 = vector.multi_reduction <add>, %22, %cst_13 [1] : vector<8x128xf32> to vector<8xf32>
    %24 = vector.shape_cast %23 : vector<8xf32> to vector<8x1xf32>
    %25 = vector.broadcast %24 : vector<8x1xf32> to vector<8x128xf32>
    %26 = arith.divf %22, %25 : vector<8x128xf32>
    %27 = vector.extract_strided_slice %26 {offsets = [0, 0], sizes = [8, 2], strides = [1, 1]} : vector<8x128xf32> to vector<8x2xf32>
    %c0_14 = arith.constant 0 : index
    %c0_15 = arith.constant 0 : index
    %28 = vector.load %arg6[%c0_14, %c0_15] : memref<8x2xf32, #tpu.memory_space<vmem>>, vector<8x2xf32>
    tpu.vector_store %arg6[%c0_14, %c0_15], %27 {strides = array<i32>} : memref<8x2xf32, #tpu.memory_space<vmem>>, vector<8x2xf32>,
    %29 = vector.extract_strided_slice %12 {offsets = [0, 2], sizes = [8, 1], strides = [1, 1]} : vector<8x128xf32> to vector<8x1xf32>
    %c0_16 = arith.constant 0 : index
    %c0_17 = arith.constant 0 : index
    %30 = vector.load %arg7[%c0_16, %c0_17] : memref<8x1xf32, #tpu.memory_space<vmem>>, vector<8x1xf32>
    tpu.vector_store %arg7[%c0_16, %c0_17], %29 {strides = array<i32>} : memref<8x1xf32, #tpu.memory_space<vmem>>, vector<8x1xf32>,
    return
  }
  func.func @transform_0(%arg0: i32) -> (i32, i32) {
    %c0_i32 = arith.constant 0 : i32
    %c0_i32_0 = arith.constant 0 : i32
    return %arg0, %c0_i32 : i32, i32
  }
  func.func @transform_1(%arg0: i32) -> (i32, i32) {
    %c0_i32 = arith.constant 0 : i32
    %c0_i32_0 = arith.constant 0 : i32
    %c0_i32_1 = arith.constant 0 : i32
    return %c0_i32, %c0_i32_0 : i32, i32
  }
  func.func @transform_2(%arg0: i32) -> (i32, i32) {
    %c0_i32 = arith.constant 0 : i32
    %c0_i32_0 = arith.constant 0 : i32
    %c0_i32_1 = arith.constant 0 : i32
    return %c0_i32, %c0_i32_0 : i32, i32
  }
  func.func @transform_3(%arg0: i32) -> (i32, i32) {
    %c0_i32 = arith.constant 0 : i32
    %c0_i32_0 = arith.constant 0 : i32
    %c0_i32_1 = arith.constant 0 : i32
    return %c0_i32, %c0_i32_0 : i32, i32
  }
  func.func @transform_4(%arg0: i32) -> (i32, i32) {
    %c0_i32 = arith.constant 0 : i32
    %c0_i32_0 = arith.constant 0 : i32
    %c0_i32_1 = arith.constant 0 : i32
    return %c0_i32, %c0_i32_0 : i32, i32
  }
  func.func @transform_5(%arg0: i32) -> (i32, i32) {
    %c0_i32 = arith.constant 0 : i32
    %c0_i32_0 = arith.constant 0 : i32
    return %arg0, %c0_i32 : i32, i32
  }
  func.func @transform_6(%arg0: i32) -> (i32, i32) {
    %c0_i32 = arith.constant 0 : i32
    %c0_i32_0 = arith.constant 0 : i32
    return %arg0, %c0_i32 : i32, i32
  }
}

</mosaic_0001>

<llo_original>
// kernel: tpu_custom_call.1
$region0: #{tpu_custom_call.1}
  #allocation0 [shape = 'u32[]', space=smem, size = 0x4, offset = 0x4, fixed_abs, tag = 'smem constant byte address 0x4 - core index']
  #allocation1 [shape = 'u32[144,128]{1,0:T(1,128)}', space=vmem, size = 0x12000, scoped, tag = 'internal scratch']
  %s0 = inlined_call_operand.vmem [shape: f32[8,4], index: 0, kind: input, shape index: {}]
  %s1 = inlined_call_operand.vmem [shape: f32[4,128], index: 1, kind: input, shape index: {}]
  %s2 = inlined_call_operand.vmem [shape: f32[1,128], index: 2, kind: input, shape index: {}]
  %s3 = inlined_call_operand.hbm [shape: f32[128,128], index: 3, kind: input, shape index: {}]
  %s4 = inlined_call_operand.vmem [shape: f32[1,128], index: 4, kind: input, shape index: {}]
  %s5 = inlined_call_operand.vmem [shape: f32[8,2], index: 5, kind: output, shape index: {0}]
  %s6 = inlined_call_operand.vmem [shape: f32[8,1], index: 6, kind: output, shape index: {1}]
  %7 = xla_tuple %s5, %s6
  %s8 = sld [smem:[#allocation0]]
  $region42: #{tpu_custom_call.1} parent=0
    _
  %s10 = ssub.s32 1, %s8
  %s11 = scalar_select 0, %s10, %s8
  $region1: #{tpu_custom_call.1} parent=0
    #allocation2 [shape = 'u8[65536]{0}', space=vmem, size = 0x10000, scoped, tag = 'input window, operand 3, single buffered']
    #allocation3 [shape = 's32[1]{0}', space=sflag, size = 0x4, scoped, tag = 'scoped memory for tpu_custom_call.1']
    %12 = vsyncpa [#allocation3], 0
    // Predicated region
    $region2: #{tpu_custom_call.1} parent=1 // pred_check
      _
    $region3: #{tpu_custom_call.1} parent=1 // pred_check_branch
      %14 = sbr.rel (0) target = $region5
    $region4: #{tpu_custom_call.1} parent=1 // pred_region
      _
    $region5: #{tpu_custom_call.1} parent=1 // pred_fallthru
      _
    // Predicated region
    $region6: #{tpu_custom_call.1} parent=1 // pred_check
      _
    $region7: #{tpu_custom_call.1} parent=1 // pred_check_branch
      %16 = sbr.rel (0) target = $region9
    $region8: #{tpu_custom_call.1} parent=1 // pred_region
      _
    $region9: #{tpu_custom_call.1} parent=1 // pred_fallthru
      _
    // Predicated region
    $region10: #{tpu_custom_call.1} parent=1 // pred_check
      _
    $region11: #{tpu_custom_call.1} parent=1 // pred_check_branch
      %18 = sbr.rel (0) target = $region13
    $region12: #{tpu_custom_call.1} parent=1 // pred_region
      _
    $region13: #{tpu_custom_call.1} parent=1 // pred_fallthru
      _
    // Predicated region
    $region14: #{tpu_custom_call.1} parent=1 // pred_check
      _
    $region15: #{tpu_custom_call.1} parent=1 // pred_check_branch
      %20 = sbr.rel (0) target = $region17
    $region16: #{tpu_custom_call.1} parent=1 // pred_region
      %s22 = ssub.s32 2048, 2048
      %23 = vsyncadd [#allocation3], %s22
      %s24 = sshll.u32 [#allocation2], 4
      %s25 = int_to_ptr.vmem [resolvable:$true] %s24
      %30 = dma.hbm_to_vmem [thread:$0]  %s3, 2048, %s25, [#allocation3], 128, 128, 8
    $region17: #{tpu_custom_call.1} parent=1 // pred_fallthru
      _
    // Predicated region
    $region18: #{tpu_custom_call.1} parent=1 // pred_check
      _
    $region19: #{tpu_custom_call.1} parent=1 // pred_check_branch
      %32 = sbr.rel (0) target = $region21
    $region20: #{tpu_custom_call.1} parent=1 // pred_region
      _
    $region21: #{tpu_custom_call.1} parent=1 // pred_fallthru
      _
    // Predicated region
    $region22: #{tpu_custom_call.1} parent=1 // pred_check
      _
    $region23: #{tpu_custom_call.1} parent=1 // pred_check_branch
      %34 = sbr.rel (0) target = $region25
    $region24: #{tpu_custom_call.1} parent=1 // pred_region
      %35 = dma.done [#allocation3], 2048
    $region25: #{tpu_custom_call.1} parent=1 // pred_fallthru
      _
    %v36 = vld [vmem:[%s1] sm:$0xf]
    %v37 = vld [vmem:[%s0] sm:$0xff]
    %v38 = vld [vmem:[%s2] sm:$0x1]
    %v40 = vlaneseq
    %v41 = vshrl.u32 %v40, 7
    %v42 = vsub.s32 0, %v41
    %v43 = vrot.slane %v38, %v42
    %vm45 = vcmask 31744
    %v47 = vsel %vm45, %v37, 0
    %vm49 = vcmask 1043456
    %v51 = vsel %vm49, %v36, 0
    %53 = vmatprep.subr.mxu0 0.0
    %54 = vmatpush1.msra.mxu0 %v51
    %55 = vmatprep.subr.mxu0 0.0
    %56 = vmatpush1.msra.mxu0 0.0
    %57 = vmatprep.subr.mxu0 0.0
    %58 = vmatpush1.msra.mxu0 0.0
    %59 = vmatprep.subr.mxu0 0.0
    %60 = vmatpush1.msra.mxu0 0.0
    %61 = vmatprep.subr.mxu0 0.0
    %62 = vmatpush1.msra.mxu0 0.0
    %63 = vmatprep.subr.mxu0 0.0
    %64 = vmatpush1.msra.mxu0 0.0
    %65 = vmatprep.subr.mxu0 0.0
    %66 = vmatpush1.msra.mxu0 0.0
    %67 = vmatprep.subr.mxu0 0.0
    %68 = vmatpush1.msra.mxu0 0.0
    %69 = vmatprep.subr.mxu0 0.0
    %70 = vmatpush1.msra.mxu0 0.0
    %71 = vmatprep.subr.mxu0 0.0
    %72 = vmatpush1.msra.mxu0 0.0
    %73 = vmatprep.subr.mxu0 0.0
    %74 = vmatpush1.msra.mxu0 0.0
    %75 = vmatprep.subr.mxu0 0.0
    %76 = vmatpush1.msra.mxu0 0.0
    %77 = vmatprep.subr.mxu0 0.0
    %78 = vmatpush1.msra.mxu0 0.0
    %79 = vmatprep.subr.mxu0 0.0
    %80 = vmatpush1.msra.mxu0 0.0
    %81 = vmatprep.subr.mxu0 0.0
    %82 = vmatpush1.msra.mxu0 0.0
    %83 = vmatprep.subr.mxu0 0.0
    %84 = vmatpush1.msra.mxu0 0.0
    %85 = vmatprep.subr.mxu0 0.0
    %86 = vmatpush1.msra.mxu0 0.0
    %87 = vmatprep.subr.mxu0 0.0
    %88 = vmatpush1.msra.mxu0 0.0
    %89 = vmatprep.subr.mxu0 0.0
    %90 = vmatpush1.msra.mxu0 0.0
    %91 = vmatprep.subr.mxu0 0.0
    %92 = vmatpush1.msra.mxu0 0.0
    %93 = vmatprep.subr.mxu0 0.0
    %94 = vmatpush1.msra.mxu0 0.0
    %95 = vmatprep.subr.mxu0 0.0
    %96 = vmatpush1.msra.mxu0 0.0
    %97 = vmatprep.subr.mxu0 0.0
    %98 = vmatpush1.msra.mxu0 0.0
    %99 = vmatprep.subr.mxu0 0.0
    %100 = vmatpush1.msra.mxu0 0.0
    %101 = vmatprep.subr.mxu0 0.0
    %102 = vmatpush1.msra.mxu0 0.0
    %103 = vmatprep.subr.mxu0 0.0
    %104 = vmatpush1.msra.mxu0 0.0
    %105 = vmatprep.subr.mxu0 0.0
    %106 = vmatpush1.msra.mxu0 0.0
    %107 = vmatprep.subr.mxu0 0.0
    %108 = vmatpush1.msra.mxu0 0.0
    %109 = vmatprep.subr.mxu0 0.0
    %110 = vmatpush1.msra.mxu0 0.0
    %111 = vmatprep.subr.mxu0 0.0
    %112 = vmatpush1.msra.mxu0 0.0
    %113 = vmatprep.subr.mxu0 0.0
    %114 = vmatpush1.msra.mxu0 0.0
    %115 = vmatprep.subr.mxu0 0.0
    %116 = vmatpush1.msra.mxu0 0.0
    %117 = vmatprep.mubr.f32.mxu0 0.0
    %118 = vmatmul.mubr.f32.gmra.mrb[0].mxu0 %v47
    %v119 = vpop.f32.mrb[0].mxu0
    %v120 = vadd.f32 %v43, %v119
    %v121 = vpop.f32.mrb[0].mxu0
    %122 = vdwg.mxu0
    %v123 = vmax.f32 %v120, 0.0
    %v124 = vld [vmem:[#allocation2] sm:$0xff]
    %v125 = vld [vmem:[#allocation2 + $0x8] sm:$0xff]
    %v126 = vld [vmem:[#allocation2 + $0x10] sm:$0xff]
    %v127 = vld [vmem:[#allocation2 + $0x18] sm:$0xff]
    %v128 = vld [vmem:[#allocation2 + $0x20] sm:$0xff]
    %v129 = vld [vmem:[#allocation2 + $0x28] sm:$0xff]
    %v130 = vld [vmem:[#allocation2 + $0x30] sm:$0xff]
    %v131 = vld [vmem:[#allocation2 + $0x38] sm:$0xff]
    %v132 = vld [vmem:[#allocation2 + $0x40] sm:$0xff]
    %v133 = vld [vmem:[#allocation2 + $0x48] sm:$0xff]
    %v134 = vld [vmem:[#allocation2 + $0x50] sm:$0xff]
    %v135 = vld [vmem:[#allocation2 + $0x58] sm:$0xff]
    %v136 = vld [vmem:[#allocation2 + $0x60] sm:$0xff]
    %v137 = vld [vmem:[#allocation2 + $0x68] sm:$0xff]
    %v138 = vld [vmem:[#allocation2 + $0x70] sm:$0xff]
    %v139 = vld [vmem:[#allocation2 + $0x78] sm:$0xff]
    %v140 = vld [vmem:[%s4] sm:$0x1]
    %v142 = vlaneseq
    %v143 = vshrl.u32 %v142, 7
    %v144 = vsub.s32 0, %v143
    %v145 = vrot.slane %v140, %v144
    %147 = vmatprep.subr.mxu0 0.0
    %148 = vmatpush1.msra.mxu0 %v124
    %149 = vmatprep.subr.mxu0 0.0
    %150 = vmatpush1.msra.mxu0 %v125
    %151 = vmatprep.subr.mxu0 0.0
    %152 = vmatpush1.msra.mxu0 %v126
    %153 = vmatprep.subr.mxu0 0.0
    %154 = vmatpush1.msra.mxu0 %v127
    %155 = vmatprep.subr.mxu0 0.0
    %156 = vmatpush1.msra.mxu0 %v128
    %157 = vmatprep.subr.mxu0 0.0
    %158 = vmatpush1.msra.mxu0 %v129
    %159 = vmatprep.subr.mxu0 0.0
    %160 = vmatpush1.msra.mxu0 %v130
    %161 = vmatprep.subr.mxu0 0.0
    %162 = vmatpush1.msra.mxu0 %v131
    %163 = vmatprep.subr.mxu0 0.0
    %164 = vmatpush1.msra.mxu0 %v132
    %165 = vmatprep.subr.mxu0 0.0
    %166 = vmatpush1.msra.mxu0 %v133
    %167 = vmatprep.subr.mxu0 0.0
    %168 = vmatpush1.msra.mxu0 %v134
    %169 = vmatprep.subr.mxu0 0.0
    %170 = vmatpush1.msra.mxu0 %v135
    %171 = vmatprep.subr.mxu0 0.0
    %172 = vmatpush1.msra.mxu0 %v136
    %173 = vmatprep.subr.mxu0 0.0
    %174 = vmatpush1.msra.mxu0 %v137
    %175 = vmatprep.subr.mxu0 0.0
    %176 = vmatpush1.msra.mxu0 %v138
    %177 = vmatprep.subr.mxu0 0.0
    %178 = vmatpush1.msra.mxu0 %v139
    %179 = vmatprep.subr.mxu0 0.0
    %180 = vmatpush1.msra.mxu0 0.0
    %181 = vmatprep.subr.mxu0 0.0
    %182 = vmatpush1.msra.mxu0 0.0
    %183 = vmatprep.subr.mxu0 0.0
    %184 = vmatpush1.msra.mxu0 0.0
    %185 = vmatprep.subr.mxu0 0.0
    %186 = vmatpush1.msra.mxu0 0.0
    %187 = vmatprep.subr.mxu0 0.0
    %188 = vmatpush1.msra.mxu0 0.0
    %189 = vmatprep.subr.mxu0 0.0
    %190 = vmatpush1.msra.mxu0 0.0
    %191 = vmatprep.subr.mxu0 0.0
    %192 = vmatpush1.msra.mxu0 0.0
    %193 = vmatprep.subr.mxu0 0.0
    %194 = vmatpush1.msra.mxu0 0.0
    %195 = vmatprep.subr.mxu0 0.0
    %196 = vmatpush1.msra.mxu0 0.0
    %197 = vmatprep.subr.mxu0 0.0
    %198 = vmatpush1.msra.mxu0 0.0
    %199 = vmatprep.subr.mxu0 0.0
    %200 = vmatpush1.msra.mxu0 0.0
    %201 = vmatprep.subr.mxu0 0.0
    %202 = vmatpush1.msra.mxu0 0.0
    %203 = vmatprep.subr.mxu0 0.0
    %204 = vmatpush1.msra.mxu0 0.0
    %205 = vmatprep.subr.mxu0 0.0
    %206 = vmatpush1.msra.mxu0 0.0
    %207 = vmatprep.subr.mxu0 0.0
    %208 = vmatpush1.msra.mxu0 0.0
    %209 = vmatprep.subr.mxu0 0.0
    %210 = vmatpush1.msra.mxu0 0.0
    %211 = vmatprep.mubr.f32.mxu0 0.0
    %212 = vmatmul.mubr.f32.gmra.mrb[0].mxu0 %v123
    %v213 = vpop.f32.mrb[0].mxu0
    %v214 = vadd.f32 %v145, %v213
    %v215 = vpop.f32.mrb[0].mxu0
    %216 = vdwg.mxu0
    %v217 = vlaneseq
    %v218 = vand.u32 %v217, 127
    %vm219 = vcmp.lt.s32.totalorder %v218, 2
    %v220 = vsel %vm219, %v214, -inf
    %221 = vmax.xlane.f32.xlu0 %v220
    %v222 = vpop.xlane.xlu0 %221
    %v223 = vsub.f32 %v220, %v222
    %v224 = vmul.f32 %v223, 1.442695
    %v225 = vpow.pop %v224
    %226 = vadd.xlane.f32.xlu0 %v225
    %v227 = vpop.xlane.xlu0 %226
    %v228 = vrcp.pop %v227
    %v229 = vmul.f32 %v225, %v228
    %vm230 = vcmask 15360
    %231 = vst.msk [vmem:[%s5] sm:$0xff] %vm230, %v229
    %233 = vrot.lane.b32.xlu0 %v214, 126
    %v234 = vpop.permute.xlu0 %233
    %vm236 = vcmask 7168
    %237 = vst.msk [vmem:[%s6] sm:$0xff] %vm236, %v234
    // Predicated region
    $region26: #{tpu_custom_call.1} parent=1 // pred_check
      _
    $region27: #{tpu_custom_call.1} parent=1 // pred_check_branch
      %239 = sbr.rel (0) target = $region29
    $region28: #{tpu_custom_call.1} parent=1 // pred_region
      _
    $region29: #{tpu_custom_call.1} parent=1 // pred_fallthru
      _
    // Predicated region
    $region30: #{tpu_custom_call.1} parent=1 // pred_check
      _
    $region31: #{tpu_custom_call.1} parent=1 // pred_check_branch
      %241 = sbr.rel (0) target = $region33
    $region32: #{tpu_custom_call.1} parent=1 // pred_region
      _
    $region33: #{tpu_custom_call.1} parent=1 // pred_fallthru
      _
    // Predicated region
    $region34: #{tpu_custom_call.1} parent=1 // pred_check
      _
    $region35: #{tpu_custom_call.1} parent=1 // pred_check_branch
      %243 = sbr.rel (0) target = $region37
    $region36: #{tpu_custom_call.1} parent=1 // pred_region
      _
    $region37: #{tpu_custom_call.1} parent=1 // pred_fallthru
      _
    // Predicated region
    $region38: #{tpu_custom_call.1} parent=1 // pred_check
      _
    $region39: #{tpu_custom_call.1} parent=1 // pred_check_branch
      %245 = sbr.rel (0) target = $region41
    $region40: #{tpu_custom_call.1} parent=1 // pred_region
      _
    $region41: #{tpu_custom_call.1} parent=1 // pred_fallthru
      _
    %246 = vsyncpa [#allocation3], 1

</llo_original>
